<compile_context>
chip_gen: v6e
topology: v6e:2x2x1
jax: 0.10.0
libtpu: 0.0.40
codegen_flags: <defaults>
</compile_context>

<pallas_src>
import math
from functools import lru_cache

import jax
import jax.numpy as jnp
from jax.experimental import pallas as pl
from jax.experimental.pallas import tpu as pltpu


def _resolve_out_shape(x, shape, start_dim, end_dim):
    """Mirror Reshape.forward's dim bookkeeping exactly."""
    a = x.ndim + start_dim if start_dim < 0 else start_dim
    z = x.ndim + end_dim if end_dim < 0 else end_dim
    return tuple(x.shape[:a]) + tuple(shape) + tuple(x.shape[z + 1:])


def reshape_forward(x, shape, start_dim=1, end_dim=-1):
    """Exact semantics of Reshape.forward (torch .view): metadata-only."""
    # TODO(synk): a pure view has no Pallas-translatable work; per the perf
    # review the zero-cost jnp.reshape IS the whole forward pass.
    return jnp.reshape(x, _resolve_out_shape(x, shape, start_dim, end_dim))


# -----------------------------------------------------------------------------
# Optional materializing copy (Pallas): one whole-array HBM->HBM DMA.
# -----------------------------------------------------------------------------

def _hbm_copy_kernel(x_hbm_ref, o_hbm_ref, sem):
    # Pure data movement: a single async copy straight between the two HBM
    # buffers.  No VPU body, no VMEM staging -- the copy is DMA/HBM-bound.
    cp = pltpu.make_async_copy(x_hbm_ref, o_hbm_ref, sem.at[0])
    cp.start()
    cp.wait()


@lru_cache(maxsize=None)
def _build_hbm_copy(shape, dtype_name):
    """Cached construction of the whole-array HBM->HBM copy pallas_call."""
    dtype = jnp.dtype(dtype_name)
    return pl.pallas_call(
        _hbm_copy_kernel,
        out_shape=jax.ShapeDtypeStruct(shape, dtype),
        in_specs=[pl.BlockSpec(memory_space=pl.ANY)],   # raw HBM ref, no auto-DMA
        out_specs=pl.BlockSpec(memory_space=pl.ANY),    # raw HBM ref, no auto-DMA
        scratch_shapes=[pltpu.SemaphoreType.DMA((1,))],
    )


# Below ~1 MiB the fixed pallas_call dispatch + DMA setup overhead dominates;
# just hand back the view instead (review item 2).
_DEFAULT_MIN_BYTES = 1 << 20


def materialized_reshape(x, shape, start_dim=1, end_dim=-1,
                         *, min_bytes=_DEFAULT_MIN_BYTES):
    """Reshape + force a fresh contiguous HBM buffer for the result.

    Only use this when a brand-new buffer is genuinely required (e.g. to
    decouple lifetimes); otherwise call reshape_forward, which is free.
    """
    out_shape = _resolve_out_shape(x, shape, start_dim, end_dim)
    nbytes = int(math.prod(x.shape)) * jnp.dtype(x.dtype).itemsize
    if x.size == 0 or nbytes < min_bytes:
        return jnp.reshape(x, out_shape)
    y = _build_hbm_copy(tuple(x.shape), jnp.dtype(x.dtype).name)(x)
    return jnp.reshape(y, out_shape)  # metadata-only target view


if __name__ == "__main__":
    key = jax.random.PRNGKey(0)
    # Reshape(4, 16, 16): decoder turning a flat latent projection back into a
    # (C=4, H=16, W=16) feature map.  Input: batch=2, features=1024.
    x = jax.random.normal(key, (2, 4 * 16 * 16), dtype=jnp.float32)
    ref = jnp.reshape(x, (2, 4, 16, 16))

    # 1) Default (fast) path: metadata-only, exactly torch .view semantics.
    y = reshape_forward(x, (4, 16, 16), start_dim=1, end_dim=-1)
    y = jax.block_until_ready(y)
    assert y.shape == (2, 4, 16, 16), y.shape
    assert y.dtype == x.dtype
    assert bool(jnp.all(y == ref))

    # 2) Exercise the Pallas HBM->HBM copy once (min_bytes=0 to bypass the
    #    small-tensor cutoff at this tiny demo size).
    y_copy = materialized_reshape(x, (4, 16, 16), start_dim=1, end_dim=-1,
                                  min_bytes=0)
    y_copy = jax.block_until_ready(y_copy)
    assert y_copy.shape == (2, 4, 16, 16), y_copy.shape
    assert y_copy.dtype == x.dtype
    assert bool(jnp.all(y_copy == ref))

    print("KERNEL_OK")
</pallas_src>

<mosaic_0001>
module attributes {stable_mosaic.version = 11 : i64} {
  func.func @_hbm_copy_kernel(%arg0: memref<2x1024xf32, #tpu.memory_space<any>>, %arg1: memref<2x1024xf32, #tpu.memory_space<any>>, %arg2: memref<1x!tpu.dma_semaphore, #tpu.memory_space<semaphore_mem>>) attributes {dimension_semantics = [], scalar_prefetch = 0 : i64, scratch_operands = 1 : i64, tpu.core_type = #tpu.core_type<tc>} {
    %c0_i32 = arith.constant 0 : i32
    %0 = tpu.memref_slice %arg2[%c0_i32] : memref<1x!tpu.dma_semaphore, #tpu.memory_space<semaphore_mem>> -> memref<1x!tpu.dma_semaphore, #tpu.memory_space<semaphore_mem>>
    %1 = tpu.memref_squeeze %0 : memref<1x!tpu.dma_semaphore, #tpu.memory_space<semaphore_mem>> -> memref<!tpu.dma_semaphore, #tpu.memory_space<semaphore_mem>>
    tpu.enqueue_dma source(%arg0 : memref<2x1024xf32, #tpu.memory_space<any>>) target(%arg1 : memref<2x1024xf32, #tpu.memory_space<any>>) target_semaphore(%1 : memref<!tpu.dma_semaphore, #tpu.memory_space<semaphore_mem>>)
    %c0_i32_0 = arith.constant 0 : i32
    %2 = tpu.memref_slice %arg2[%c0_i32_0] : memref<1x!tpu.dma_semaphore, #tpu.memory_space<semaphore_mem>> -> memref<1x!tpu.dma_semaphore, #tpu.memory_space<semaphore_mem>>
    %3 = tpu.memref_squeeze %2 : memref<1x!tpu.dma_semaphore, #tpu.memory_space<semaphore_mem>> -> memref<!tpu.dma_semaphore, #tpu.memory_space<semaphore_mem>>
    tpu.wait_dma2 semaphore(%3 : memref<!tpu.dma_semaphore, #tpu.memory_space<semaphore_mem>>) src(%arg0 : memref<2x1024xf32, #tpu.memory_space<any>>) dst(%arg1 : memref<2x1024xf32, #tpu.memory_space<any>>)
    return
  }
}

</mosaic_0001>

<llo_original>
// kernel: tpu_custom_call.1
$region0: #{tpu_custom_call.1}
  #allocation0 [shape = 'u32[]', space=smem, size = 0x4, offset = 0x4, fixed_abs, tag = 'smem constant byte address 0x4 - core index']
  #allocation1 [shape = 'u32[144,128]{1,0:T(1,128)}', space=vmem, size = 0x12000, scoped, tag = 'internal scratch']
  #allocation2 [shape = 's32[1]{0}', space=sflag, size = 0x4, scoped, tag = 'scratch operand']
  #allocation3 [shape = 's32[]', space=sflag, size = 0x4, offset = 0, fixed_abs, tag = 'sflag constant byte address 0x0 - dummy sync flag']
  #allocation4 [shape = 'u32[0]{0}', space=smem, size = 0, offset = 0, fixed_abs, tag = 'smem constant byte address 0x0 - null']
  %s0 = inlined_call_operand.hbm [shape: f32[2,1024], index: 0, kind: input, shape index: {}]
  %s1 = inlined_call_operand.hbm [shape: f32[2,1024], index: 1, kind: output, shape index: {}]
  %s2 = sld [smem:[#allocation0]]
  $region2: #{tpu_custom_call.1} parent=0
    _
  %s4 = ssub.s32 1, %s2
  %s5 = scalar_select 0, %s4, %s2
  %s7 = sshll.u32 1, 14
  %s8 = sxor.u32 4294967295, %s7
  %12 = dma.general %s0, 256, %s1, [#allocation2], 131072, [#allocation4], 0, 0
  %s13 = smul.u32 2, 1
  %s14 = smul.u32 %s13, 8
  %s15 = sshll.u32 %s14, 4
  %16 = dma.done [#allocation2], %s15
  %17 = vsyncmov [#allocation2]
  %s18 = vpop.sfrf %17
  %p19 = scmp.eq.s32.totalorder %s18, 0
  %p20 = pneg %p19
  %22 = shalt.err (%p20)

</llo_original>
